<compile_context>
chip_gen: v7x
topology: tpu7x:2x2x1
jax: 0.10.0
libtpu: 0.0.40
codegen_flags: <defaults>
</compile_context>

<pallas_src>
from functools import partial

import numpy as np
import jax
import jax.numpy as jnp
from jax.experimental import pallas as pl
from jax.experimental.pallas import tpu as pltpu


# ------------------------- model config (small shapes) -----------------------
SEQ_LEN = 8          # seqLength
SEQ_FEAT = 4         # seqFeatureNum
SAL_W = 4            # saliencyWidth
SAL_NUM = 2          # saliencyNum
N_OUT = 2            # n_output
DROPOUT = 0.5        # dropoutRate (eval mode -> identity)

SEQ_SIZE = SEQ_LEN * SEQ_FEAT                  # 32
SAL_SIZE = SAL_W * SAL_W * SAL_NUM             # 32
X_DIM = SEQ_SIZE + SAL_SIZE                    # 64
X_PAD = 128                                    # lane-dense padded input width
CONV_OUT = 128                                 # seqCNN1D_outChannels
KSIZE = 2
POOL = 2
L_CONV = SEQ_LEN - KSIZE + 1                   # 7
T_POOL = L_CONV // POOL                        # 3
N_TIME = T_POOL * POOL                         # 6 conv steps actually used
SEQ_CNN_OUT = T_POOL * CONV_OUT                # 384  (seqCNN1D_outputSize)
SAL_FC_OUT = 64
PRD_IN = SAL_FC_OUT + SEQ_CNN_OUT              # 448  (prdFC_inputSize)
PRD_H = 128
BN_EPS = 1e-5

SAL_COL0 = T_POOL * CONV_OUT                   # 384: saliency block start lane (half A)
A_HALF = (T_POOL + 1) * CONV_OUT               # 512: half-width of stage-1 output
STAGE1_W = 2 * A_HALF                          # 1024: stage-1 output lanes
A1_DIM = A_HALF                                # 512: fused layer-1 input lanes
W2_OFF = A1_DIM                                # 512
W3_OFF = A1_DIM + PRD_H                        # 640
WREST_ROWS = A1_DIM + 2 * PRD_H                # 768


def _round_up(a, b):
    return ((a + b - 1) // b) * b


def _choose_tiling(batch, block_rows):
    """Row-tile TM and padded batch Bp = (even #steps) * TM, TM multiple of 8."""
    bp8 = _round_up(max(batch, 1), 8)
    nsteps = max(2, -(-bp8 // block_rows))     # >=2 steps so v7x uses both TCs
    if nsteps % 2:
        nsteps += 1                            # even step count
    tm = _round_up(-(-bp8 // nsteps), 8)
    return tm, nsteps * tm


# --------------------------------- kernel ------------------------------------
def dgaze_kernel(x_ref, w1_ref, sh1_ref, wr_ref, shr_ref, out_ref):
    # Stage 1: fused Conv1d(k=2, t=0..5) + SaliencyFC as one bf16 block matmul,
    # BN/bias scales pre-folded into weight columns; then shift + ReLU (f32).
    x = x_ref[...].astype(jnp.bfloat16)
    h = jnp.dot(x, w1_ref[...], preferred_element_type=jnp.float32)
    h = jnp.maximum(h + sh1_ref[...], 0.0)                        # (TM, 1024)

    # MaxPool1d(2) + saliency concat in ONE vectorized max: columns were laid
    # out as [t0,t2,t4,sal | t1,t3,t5,zeros]; sal pairs with zeros (identity
    # since it is already post-ReLU).
    a1 = jnp.maximum(h[:, :A_HALF], h[:, A_HALF:]).astype(jnp.bfloat16)   # (TM, 512)

    # PrdFC layer 1 (single K=512 dot), layer 2, layer 3 — weights packed in wr.
    h1 = jnp.dot(a1, wr_ref[0:A1_DIM, :], preferred_element_type=jnp.float32)
    h1 = jnp.maximum(h1 + shr_ref[0:1, :], 0.0).astype(jnp.bfloat16)
    h2 = jnp.dot(h1, wr_ref[W2_OFF:W3_OFF, :], preferred_element_type=jnp.float32)
    h2 = jnp.maximum(h2 + shr_ref[1:2, :], 0.0).astype(jnp.bfloat16)
    out_ref[...] = (jnp.dot(h2, wr_ref[W3_OFF:WREST_ROWS, :],
                            preferred_element_type=jnp.float32)
                    + shr_ref[2:3, :])                            # (TM, 128) lane-dense


# ------------------------------ parameter init --------------------------------
def bn_params(key, n):
    k1, k2, k3, k4 = jax.random.split(key, 4)
    gamma = 1.0 + 0.1 * jax.random.normal(k1, (n,), jnp.float32)
    beta = 0.1 * jax.random.normal(k2, (n,), jnp.float32)
    mean = 0.1 * jax.random.normal(k3, (n,), jnp.float32)
    var = jax.random.uniform(k4, (n,), jnp.float32, minval=0.5, maxval=1.5)
    return gamma, beta, mean, var


def init_params(key):
    ks = jax.random.split(key, 14)
    nrm = lambda k, s: 0.1 * jax.random.normal(k, s, jnp.float32)
    p = {}
    p['Wc'] = nrm(ks[0], (CONV_OUT, SEQ_FEAT, KSIZE))     # Conv1d weight (O, C, K)
    p['bc'] = nrm(ks[1], (CONV_OUT,))
    p['bn1'] = bn_params(ks[2], CONV_OUT)
    p['Wsal'] = nrm(ks[3], (SAL_FC_OUT, SAL_SIZE))
    p['bsal'] = nrm(ks[4], (SAL_FC_OUT,))
    p['bns'] = bn_params(ks[5], SAL_FC_OUT)
    p['W1'] = nrm(ks[6], (PRD_H, PRD_IN))
    p['b1'] = nrm(ks[7], (PRD_H,))
    p['bnp1'] = bn_params(ks[8], PRD_H)
    p['W2'] = nrm(ks[9], (PRD_H, PRD_H))
    p['b2'] = nrm(ks[10], (PRD_H,))
    p['bnp2'] = bn_params(ks[11], PRD_H)
    p['W3'] = nrm(ks[12], (N_OUT, PRD_H))
    p['b3'] = nrm(ks[13], (N_OUT,))
    return p


def fold_bn(bias, bn):
    """Fold Linear/Conv bias + eval-mode BatchNorm into (scale, shift)."""
    gamma, beta, mean, var = bn
    scale = gamma / jnp.sqrt(var + BN_EPS)
    shift = beta - mean * scale + bias * scale
    return scale, shift


def prep_kernel_args(params):
    sc1, sh1 = fold_bn(params['bc'], params['bn1'])
    scs, shs = fold_bn(params['bsal'], params['bns'])
    scp1, shp1 = fold_bn(params['b1'], params['bnp1'])
    scp2, shp2 = fold_bn(params['b2'], params['bnp2'])

    # ---- stage-1 weight (128, 1024): conv blocks + saliency FC, reordered so
    # half A holds even conv steps + saliency, half B holds odd conv steps.
    # wc8[k*F + f, o] = Wc[o, f, k]; BN scale folded into columns.
    wc8 = jnp.transpose(params['Wc'], (2, 1, 0)).reshape(KSIZE * SEQ_FEAT, CONV_OUT)
    wc8 = wc8 * sc1[None, :]
    wstage1 = jnp.zeros((X_PAD, STAGE1_W), jnp.float32)
    for t in range(N_TIME):
        col = (t // 2) * CONV_OUT + (t % 2) * A_HALF
        wstage1 = wstage1.at[t * SEQ_FEAT:t * SEQ_FEAT + KSIZE * SEQ_FEAT,
                             col:col + CONV_OUT].set(wc8)
    wsal = params['Wsal'].T * scs[None, :]                       # (32, 64)
    wstage1 = wstage1.at[SEQ_SIZE:SEQ_SIZE + SAL_SIZE,
                         SAL_COL0:SAL_COL0 + SAL_FC_OUT].set(wsal)
    wstage1 = wstage1.astype(jnp.bfloat16)

    shift1 = jnp.concatenate(
        [jnp.tile(sh1, T_POOL),                                   # conv t = 0,2,4
         jnp.pad(shs, (0, CONV_OUT - SAL_FC_OUT)),                # saliency + pad
         jnp.tile(sh1, T_POOL),                                   # conv t = 1,3,5
         jnp.zeros((CONV_OUT,), jnp.float32)]).reshape(1, STAGE1_W)

    # ---- PrdFC layer 1 as one (512,128) slab matching a1's lane layout ----
    W1 = params['W1']
    w1seq = W1[:, :SEQ_CNN_OUT].reshape(PRD_H, CONV_OUT, T_POOL)          # [r,o,t']
    w1seq = jnp.transpose(w1seq, (2, 1, 0)).reshape(T_POOL * CONV_OUT, PRD_H)
    w1sal = W1[:, SEQ_CNN_OUT:].T                                         # (64,128)
    w1slab = jnp.concatenate(
        [w1seq, w1sal, jnp.zeros((CONV_OUT - SAL_FC_OUT, PRD_H), jnp.float32)],
        axis=0) * scp1[None, :]                                           # (512,128)

    w2slab = params['W2'].T * scp2[None, :]                               # (128,128)
    w3pad = jnp.pad(params['W3'].T, ((0, 0), (0, PRD_H - N_OUT)))         # (128,128)
    wrest = jnp.concatenate([w1slab, w2slab, w3pad], axis=0).astype(jnp.bfloat16)

    shrest = jnp.zeros((8, PRD_H), jnp.float32)
    shrest = shrest.at[0].set(shp1).at[1].set(shp2).at[2, :N_OUT].set(params['b3'])

    return (wstage1, shift1, wrest, shrest)


# ------------------------------- wrapper --------------------------------------
@partial(jax.jit, static_argnames=("block_rows",))
def dgaze_pallas(x, kargs, block_rows=512):
    B = x.shape[0]
    TM, Bp = _choose_tiling(B, block_rows)
    x = jnp.pad(x, ((0, Bp - B), (0, X_PAD - X_DIM)))            # lane-dense x tile
    wstage1, shift1, wrest, shrest = kargs

    flops = 2 * Bp * (X_PAD * STAGE1_W + A1_DIM * PRD_H + PRD_H * PRD_H + PRD_H * PRD_H)
    bytes_accessed = (4 * Bp * X_PAD + 2 * X_PAD * STAGE1_W + 4 * STAGE1_W
                      + 2 * WREST_ROWS * PRD_H + 4 * 8 * PRD_H + 4 * Bp * PRD_H)

    out = pl.pallas_call(
        dgaze_kernel,
        out_shape=jax.ShapeDtypeStruct((Bp, PRD_H), jnp.float32),
        grid=(Bp // TM,),
        in_specs=[
            pl.BlockSpec((TM, X_PAD), lambda i: (i, 0)),
            # constant index_map -> weights fetched once and stay resident
            pl.BlockSpec((X_PAD, STAGE1_W), lambda i: (0, 0)),
            pl.BlockSpec((1, STAGE1_W), lambda i: (0, 0)),
            pl.BlockSpec((WREST_ROWS, PRD_H), lambda i: (0, 0)),
            pl.BlockSpec((8, PRD_H), lambda i: (0, 0)),
        ],
        out_specs=pl.BlockSpec((TM, PRD_H), lambda i: (i, 0)),
        compiler_params=pltpu.CompilerParams(dimension_semantics=("parallel",)),
        cost_estimate=pl.CostEstimate(flops=flops, transcendentals=0,
                                      bytes_accessed=bytes_accessed),
    )(x, wstage1, shift1, wrest, shrest)
    return out[:B, :N_OUT]


# -------------- folded/bf16 reference (mirrors the kernel math exactly) -------
def dgaze_folded_ref(x, kargs):
    wstage1, shift1, wrest, shrest = kargs
    xp = jnp.pad(x, ((0, 0), (0, X_PAD - X_DIM))).astype(jnp.bfloat16)
    h = jnp.maximum(jnp.dot(xp, wstage1, preferred_element_type=jnp.float32) + shift1, 0.0)
    a1 = jnp.maximum(h[:, :A_HALF], h[:, A_HALF:]).astype(jnp.bfloat16)
    h1 = jnp.maximum(jnp.dot(a1, wrest[:A1_DIM], preferred_element_type=jnp.float32)
                     + shrest[0:1], 0.0).astype(jnp.bfloat16)
    h2 = jnp.maximum(jnp.dot(h1, wrest[W2_OFF:W3_OFF], preferred_element_type=jnp.float32)
                     + shrest[1:2], 0.0).astype(jnp.bfloat16)
    out = jnp.dot(h2, wrest[W3_OFF:], preferred_element_type=jnp.float32) + shrest[2:3]
    return out[:, :N_OUT]


# ------------------------- pure-JAX reference (PyTorch semantics) -------------
def dgaze_ref(x, p):
    B = x.shape[0]
    seq = x[:, :SEQ_SIZE].reshape(B, SEQ_LEN, SEQ_FEAT)
    sal = x[:, SEQ_SIZE:]
    hoc = jnp.transpose(seq, (0, 2, 1))                        # NCW, like PyTorch
    conv = jnp.zeros((B, CONV_OUT, L_CONV), jnp.float32)
    for k in range(KSIZE):
        conv = conv + jnp.einsum('of,bft->bot', p['Wc'][:, :, k], hoc[:, :, k:k + L_CONV])
    conv = conv + p['bc'][None, :, None]
    g, b, m, v = p['bn1']
    conv = (conv - m[None, :, None]) / jnp.sqrt(v + BN_EPS)[None, :, None] \
        * g[None, :, None] + b[None, :, None]
    conv = jnp.maximum(conv, 0.0)
    pooled = jnp.max(conv[:, :, :T_POOL * POOL].reshape(B, CONV_OUT, T_POOL, POOL), axis=-1)
    seq_out = pooled.reshape(B, SEQ_CNN_OUT)                   # channel-major flatten

    salh = sal @ p['Wsal'].T + p['bsal']
    g, b, m, v = p['bns']
    salh = jnp.maximum((salh - m) / jnp.sqrt(v + BN_EPS) * g + b, 0.0)

    h = jnp.concatenate([seq_out, salh], axis=1)

    def lin_bn_relu(h, W, bb, bn):
        g, be, m, v = bn
        h = h @ W.T + bb
        return jnp.maximum((h - m) / jnp.sqrt(v + BN_EPS) * g + be, 0.0)

    h = lin_bn_relu(h, p['W1'], p['b1'], p['bnp1'])
    h = lin_bn_relu(h, p['W2'], p['b2'], p['bnp2'])
    return h @ p['W3'].T + p['b3']


# --------------------------------- main ---------------------------------------
if __name__ == "__main__":
    B = 8
    key = jax.random.PRNGKey(0)
    kx, kp = jax.random.split(key)
    x = jax.random.normal(kx, (B, SEQ_SIZE + SAL_SIZE), jnp.float32)
    params = init_params(kp)
    kargs = prep_kernel_args(params)

    out = dgaze_pallas(x, kargs)
    out = jax.block_until_ready(out)
    assert out.shape == (B, N_OUT)

    # 1) Exact-math check: kernel vs the same folded/bf16 computation in plain JAX.
    folded = dgaze_folded_ref(x, kargs)
    np.testing.assert_allclose(np.asarray(out), np.asarray(folded), rtol=1e-4, atol=1e-4)

    # 2) Semantics check vs the f32 PyTorch-style reference.  The kernel multiplies
    #    on the bf16 MXU path with BN scales folded into the weights, so agreement
    #    is at bf16 operand precision, not f32.
    ref = dgaze_ref(x, params)
    np.testing.assert_allclose(np.asarray(out), np.asarray(ref), rtol=3e-2, atol=3e-2)
    print("KERNEL_OK")
</pallas_src>

<mosaic_0001>
module attributes {stable_mosaic.version = 11 : i64} {
  func.func @dgaze_kernel(%arg0: i32, %arg1: memref<8x128xf32, #tpu.memory_space<vmem>>, %arg2: memref<128x1024xbf16, #tpu.memory_space<vmem>>, %arg3: memref<1x1024xf32, #tpu.memory_space<vmem>>, %arg4: memref<768x128xbf16, #tpu.memory_space<vmem>>, %arg5: memref<8x128xf32, #tpu.memory_space<vmem>>, %arg6: memref<8x128xf32, #tpu.memory_space<vmem>>) attributes {dimension_semantics = [#tpu.dimension_semantics<parallel>], iteration_bounds = array<i64: 2>, scalar_prefetch = 0 : i64, scratch_operands = 0 : i64, tpu.core_type = #tpu.core_type<tc>, window_params = [{transform_indices = @transform_0, window_bounds = array<i64: 8, 128>}, {pipeline_mode = #tpu.pipeline_mode<synchronous>, transform_indices = @transform_1, window_bounds = array<i64: 128, 1024>}, {pipeline_mode = #tpu.pipeline_mode<synchronous>, transform_indices = @transform_2, window_bounds = array<i64: 1, 1024>}, {pipeline_mode = #tpu.pipeline_mode<synchronous>, transform_indices = @transform_3, window_bounds = array<i64: 768, 128>}, {pipeline_mode = #tpu.pipeline_mode<synchronous>, transform_indices = @transform_4, window_bounds = array<i64: 8, 128>}, {transform_indices = @transform_5, window_bounds = array<i64: 8, 128>}]} {
    %c0 = arith.constant 0 : index
    %c0_0 = arith.constant 0 : index
    %0 = vector.load %arg1[%c0, %c0_0] : memref<8x128xf32, #tpu.memory_space<vmem>>, vector<8x128xf32>
    %1 = arith.truncf %0 : vector<8x128xf32> to vector<8x128xbf16>
    %c0_1 = arith.constant 0 : index
    %c0_2 = arith.constant 0 : index
    %2 = vector.load %arg2[%c0_1, %c0_2] : memref<128x1024xbf16, #tpu.memory_space<vmem>>, vector<128x1024xbf16>
    %cst = arith.constant dense<0.000000e+00> : vector<8x1024xf32>
    %3 = tpu.matmul %1, %2, %cst {dimension_numbers = #tpu.dot_dimension_numbers<[1], [0], [0], [1], [0, 0, 1, 1], [], []>} : vector<8x128xbf16>, vector<128x1024xbf16>, vector<8x1024xf32> -> vector<8x1024xf32>
    %c0_3 = arith.constant 0 : index
    %c0_4 = arith.constant 0 : index
    %4 = vector.load %arg3[%c0_3, %c0_4] : memref<1x1024xf32, #tpu.memory_space<vmem>>, vector<1x1024xf32>
    %5 = vector.broadcast %4 : vector<1x1024xf32> to vector<8x1024xf32>
    %6 = arith.addf %3, %5 : vector<8x1024xf32>
    %cst_5 = arith.constant 0.000000e+00 : f32
    %7 = vector.broadcast %cst_5 : f32 to vector<8x1024xf32>
    %8 = arith.maximumf %6, %7 : vector<8x1024xf32>
    %9 = vector.extract_strided_slice %8 {offsets = [0, 0], sizes = [8, 512], strides = [1, 1]} : vector<8x1024xf32> to vector<8x512xf32>
    %10 = vector.extract_strided_slice %8 {offsets = [0, 512], sizes = [8, 512], strides = [1, 1]} : vector<8x1024xf32> to vector<8x512xf32>
    %11 = arith.maximumf %9, %10 : vector<8x512xf32>
    %12 = arith.truncf %11 : vector<8x512xf32> to vector<8x512xbf16>
    %c0_6 = arith.constant 0 : index
    %c0_7 = arith.constant 0 : index
    %13 = vector.load %arg4[%c0_6, %c0_7] : memref<768x128xbf16, #tpu.memory_space<vmem>>, vector<512x128xbf16>
    %cst_8 = arith.constant dense<0.000000e+00> : vector<8x128xf32>
    %14 = tpu.matmul %12, %13, %cst_8 {dimension_numbers = #tpu.dot_dimension_numbers<[1], [0], [0], [1], [0, 0, 1, 1], [], []>} : vector<8x512xbf16>, vector<512x128xbf16>, vector<8x128xf32> -> vector<8x128xf32>
    %c0_9 = arith.constant 0 : index
    %c0_10 = arith.constant 0 : index
    %15 = vector.load %arg5[%c0_9, %c0_10] : memref<8x128xf32, #tpu.memory_space<vmem>>, vector<1x128xf32>
    %16 = vector.broadcast %15 : vector<1x128xf32> to vector<8x128xf32>
    %17 = arith.addf %14, %16 : vector<8x128xf32>
    %cst_11 = arith.constant 0.000000e+00 : f32
    %18 = vector.broadcast %cst_11 : f32 to vector<8x128xf32>
    %19 = arith.maximumf %17, %18 : vector<8x128xf32>
    %20 = arith.truncf %19 : vector<8x128xf32> to vector<8x128xbf16>
    %c512 = arith.constant 512 : index
    %c0_12 = arith.constant 0 : index
    %21 = vector.load %arg4[%c512, %c0_12] : memref<768x128xbf16, #tpu.memory_space<vmem>>, vector<128x128xbf16>
    %cst_13 = arith.constant dense<0.000000e+00> : vector<8x128xf32>
    %22 = tpu.matmul %20, %21, %cst_13 {dimension_numbers = #tpu.dot_dimension_numbers<[1], [0], [0], [1], [0, 0, 1, 1], [], []>} : vector<8x128xbf16>, vector<128x128xbf16>, vector<8x128xf32> -> vector<8x128xf32>
    %c1 = arith.constant 1 : index
    %c0_14 = arith.constant 0 : index
    %23 = vector.load %arg5[%c1, %c0_14] : memref<8x128xf32, #tpu.memory_space<vmem>>, vector<1x128xf32>
    %24 = vector.broadcast %23 : vector<1x128xf32> to vector<8x128xf32>
    %25 = arith.addf %22, %24 : vector<8x128xf32>
    %cst_15 = arith.constant 0.000000e+00 : f32
    %26 = vector.broadcast %cst_15 : f32 to vector<8x128xf32>
    %27 = arith.maximumf %25, %26 : vector<8x128xf32>
    %28 = arith.truncf %27 : vector<8x128xf32> to vector<8x128xbf16>
    %c640 = arith.constant 640 : index
    %c0_16 = arith.constant 0 : index
    %29 = vector.load %arg4[%c640, %c0_16] : memref<768x128xbf16, #tpu.memory_space<vmem>>, vector<128x128xbf16>
    %cst_17 = arith.constant dense<0.000000e+00> : vector<8x128xf32>
    %30 = tpu.matmul %28, %29, %cst_17 {dimension_numbers = #tpu.dot_dimension_numbers<[1], [0], [0], [1], [0, 0, 1, 1], [], []>} : vector<8x128xbf16>, vector<128x128xbf16>, vector<8x128xf32> -> vector<8x128xf32>
    %c2 = arith.constant 2 : index
    %c0_18 = arith.constant 0 : index
    %31 = vector.load %arg5[%c2, %c0_18] : memref<8x128xf32, #tpu.memory_space<vmem>>, vector<1x128xf32>
    %32 = vector.broadcast %31 : vector<1x128xf32> to vector<8x128xf32>
    %33 = arith.addf %30, %32 : vector<8x128xf32>
    %c0_19 = arith.constant 0 : index
    %c0_20 = arith.constant 0 : index
    %34 = vector.load %arg6[%c0_19, %c0_20] : memref<8x128xf32, #tpu.memory_space<vmem>>, vector<8x128xf32>
    tpu.vector_store %arg6[%c0_19, %c0_20], %33 {strides = array<i32>} : memref<8x128xf32, #tpu.memory_space<vmem>>, vector<8x128xf32>,
    return
  }
  func.func @transform_0(%arg0: i32) -> (i32, i32) {
    %c0_i32 = arith.constant 0 : i32
    %c0_i32_0 = arith.constant 0 : i32
    return %arg0, %c0_i32 : i32, i32
  }
  func.func @transform_1(%arg0: i32) -> (i32, i32) {
    %c0_i32 = arith.constant 0 : i32
    %c0_i32_0 = arith.constant 0 : i32
    %c0_i32_1 = arith.constant 0 : i32
    return %c0_i32, %c0_i32_0 : i32, i32
  }
  func.func @transform_2(%arg0: i32) -> (i32, i32) {
    %c0_i32 = arith.constant 0 : i32
    %c0_i32_0 = arith.constant 0 : i32
    %c0_i32_1 = arith.constant 0 : i32
    return %c0_i32, %c0_i32_0 : i32, i32
  }
  func.func @transform_3(%arg0: i32) -> (i32, i32) {
    %c0_i32 = arith.constant 0 : i32
    %c0_i32_0 = arith.constant 0 : i32
    %c0_i32_1 = arith.constant 0 : i32
    return %c0_i32, %c0_i32_0 : i32, i32
  }
  func.func @transform_4(%arg0: i32) -> (i32, i32) {
    %c0_i32 = arith.constant 0 : i32
    %c0_i32_0 = arith.constant 0 : i32
    %c0_i32_1 = arith.constant 0 : i32
    return %c0_i32, %c0_i32_0 : i32, i32
  }
  func.func @transform_5(%arg0: i32) -> (i32, i32) {
    %c0_i32 = arith.constant 0 : i32
    %c0_i32_0 = arith.constant 0 : i32
    return %arg0, %c0_i32 : i32, i32
  }
}

</mosaic_0001>

<llo_original>
// kernel: dgaze_pallas.1
$region0: #{dgaze_pallas.1}
  #allocation0 [shape = 'u32[]', space=smem, size = 0x4, offset = 0x4, fixed_abs, tag = 'smem constant byte address 0x4 - core index']
  #allocation1 [shape = 'u32[144,128]{1,0:T(1,128)}', space=vmem, size = 0x12000, scoped, tag = 'internal scratch']
  %s0 = inlined_call_operand.vmem [shape: f32[16,128], index: 0, kind: input, shape index: {}]
  %s1 = inlined_call_operand.hbm [shape: bf16[128,1024], index: 1, kind: input, shape index: {}]
  %s2 = inlined_call_operand.vmem [shape: f32[1,1024], index: 2, kind: input, shape index: {}]
  %s3 = inlined_call_operand.hbm [shape: bf16[768,128], index: 3, kind: input, shape index: {}]
  %s4 = inlined_call_operand.vmem [shape: f32[8,128], index: 4, kind: input, shape index: {}]
  %s5 = inlined_call_operand.vmem [shape: f32[16,128], index: 5, kind: output, shape index: {}]
  %s6 = sld [smem:[#allocation0]]
  $region61: #{dgaze_pallas.1} parent=0
    _
  %s8 = ssub.s32 1, %s6
  %s9 = scalar_select 0, %s8, %s6
  $region1: #{dgaze_pallas.1} parent=0
    #allocation2 [shape = 'u8[262144]{0}', space=vmem, size = 0x40000, scoped, tag = 'input window, operand 1, single buffered']
    #allocation3 [shape = 's32[2]{0}', space=sflag, size = 0x8, scoped, tag = 'scoped memory for dgaze_pallas.1']
    #allocation4 [shape = 'u8[196608]{0}', space=vmem, size = 0x30000, scoped, tag = 'input window, operand 3, single buffered']
    #allocation5 [shape = 's32[1]{0}', space=sflag, size = 0x4, scoped, tag = 'scoped memory for dgaze_pallas.1']
    %10 = vsyncpa [#allocation3], 0
    %11 = vsyncpa [#allocation5], 0
    loop: start=0, step=1, limit=4
    $region2: #{dgaze_pallas.1} parent=1 // loop_pre_header
      _
    $region3: #{dgaze_pallas.1} parent=1 // loop_header
      %s13 = sphi 0, %s17
      %p14 = scmp.ge.s32.totalorder %s13, 4
      %s23 = sphi 0, %s25
      %s26 = sphi 0, %s23
      %s27 = sphi 0, %s26
      %s43 = sphi 0, %s27
      %s47 = sphi 0, %s47
      %s49 = sphi 0, %s47
      %s50 = sphi 0, %s49
      %s64 = sphi 0, %s50
      %s68 = sphi 0, %s68
      %s70 = sphi 0, %s68
      %s71 = sphi 0, %s70
      %s85 = sphi 0, %s71
      %s89 = sphi 0, %s89
      %s91 = sphi 0, %s89
      %s92 = sphi 0, %s91
      %s106 = sphi 0, %s92
      %s110 = sphi 0, %s110
      %s112 = sphi 0, %s110
      %s113 = sphi 0, %s112
      %s127 = sphi 0, %s113
      %s133 = sphi 0, %s135
      %s136 = sphi 0, %s133
      %s137 = sphi 0, %s136
      %s153 = sphi 0, %s137
    $region4: #{dgaze_pallas.1} parent=1 // loop_header_branch
      %16 = sbr.rel (%p14) target = $region8
    $region5: #{dgaze_pallas.1} parent=1 // loop_body
      %s18 = ssub.s32 %s13, 1
      %s19 = ssub.s32 %s13, 2
      %s20 = sadd.s32 %s13, 1
      %s21 = ssub.s32 %s13, %s20
      %p22 = scmp.eq.s32.totalorder %s21, 0
      %s24 = sadd.s32 %s23, 1
      %s25 = scalar_select %p22, %s23, %s24
      %p28 = pneg %p22
      %p29 = scmp.eq.s32.totalorder %s13, 1
      %p30 = por %p28, %p29
      %p31 = scmp.ne.s32.totalorder %s23, %s26
      %p32 = scmp.eq.s32.totalorder %s13, 0
      %p33 = por %p31, %p32
      %p34 = scmp.ne.s32.totalorder %s23, %s26
      %p35 = scmp.eq.s32.totalorder %s18, 1
      %p36 = por %p34, %p35
      %p37 = scmp.ne.s32.totalorder %s26, %s27
      %p38 = scmp.eq.s32.totalorder %s18, 0
      %p39 = por %p37, %p38
      %p40 = scmp.ne.s32.totalorder %s26, %s27
      %p41 = scmp.eq.s32.totalorder %s19, 1
      %p42 = por %p40, %p41
      %p44 = scmp.ne.s32.totalorder %s27, %s43
      %p45 = scmp.eq.s32.totalorder %s19, 0
      %p46 = por %p44, %p45
      %s48 = sadd.s32 %s47, 1
      %p51 = scmp.eq.s32.totalorder %s13, 1
      %p52 = scmp.ne.s32.totalorder %s47, %s49
      %p53 = scmp.eq.s32.totalorder %s13, 0
      %p54 = por %p52, %p53
      %p55 = scmp.ne.s32.totalorder %s47, %s49
      %p56 = scmp.eq.s32.totalorder %s18, 1
      %p57 = por %p55, %p56
      %p58 = scmp.ne.s32.totalorder %s49, %s50
      %p59 = scmp.eq.s32.totalorder %s18, 0
      %p60 = por %p58, %p59
      %p61 = scmp.ne.s32.totalorder %s49, %s50
      %p62 = scmp.eq.s32.totalorder %s19, 1
      %p63 = por %p61, %p62
      %p65 = scmp.ne.s32.totalorder %s50, %s64
      %p66 = scmp.eq.s32.totalorder %s19, 0
      %p67 = por %p65, %p66
      %s69 = sadd.s32 %s68, 1
      %p72 = scmp.eq.s32.totalorder %s13, 1
      %p73 = scmp.ne.s32.totalorder %s68, %s70
      %p74 = scmp.eq.s32.totalorder %s13, 0
      %p75 = por %p73, %p74
      %p76 = scmp.ne.s32.totalorder %s68, %s70
      %p77 = scmp.eq.s32.totalorder %s18, 1
      %p78 = por %p76, %p77
      %p79 = scmp.ne.s32.totalorder %s70, %s71
      %p80 = scmp.eq.s32.totalorder %s18, 0
      %p81 = por %p79, %p80
      %p82 = scmp.ne.s32.totalorder %s70, %s71
      %p83 = scmp.eq.s32.totalorder %s19, 1
      %p84 = por %p82, %p83
      %p86 = scmp.ne.s32.totalorder %s71, %s85
      %p87 = scmp.eq.s32.totalorder %s19, 0
      %p88 = por %p86, %p87
      %s90 = sadd.s32 %s89, 1
      %p93 = scmp.eq.s32.totalorder %s13, 1
      %p94 = scmp.ne.s32.totalorder %s89, %s91
      %p95 = scmp.eq.s32.totalorder %s13, 0
      %p96 = por %p94, %p95
      %p97 = scmp.ne.s32.totalorder %s89, %s91
      %p98 = scmp.eq.s32.totalorder %s18, 1
      %p99 = por %p97, %p98
      %p100 = scmp.ne.s32.totalorder %s91, %s92
      %p101 = scmp.eq.s32.totalorder %s18, 0
      %p102 = por %p100, %p101
      %p103 = scmp.ne.s32.totalorder %s91, %s92
      %p104 = scmp.eq.s32.totalorder %s19, 1
      %p105 = por %p103, %p104
      %p107 = scmp.ne.s32.totalorder %s92, %s106
      %p108 = scmp.eq.s32.totalorder %s19, 0
      %p109 = por %p107, %p108
      %s111 = sadd.s32 %s110, 1
      %p114 = scmp.eq.s32.totalorder %s13, 1
      %p115 = scmp.ne.s32.totalorder %s110, %s112
      %p116 = scmp.eq.s32.totalorder %s13, 0
      %p117 = por %p115, %p116
      %p118 = scmp.ne.s32.totalorder %s110, %s112
      %p119 = scmp.eq.s32.totalorder %s18, 1
      %p120 = por %p118, %p119
      %p121 = scmp.ne.s32.totalorder %s112, %s113
      %p122 = scmp.eq.s32.totalorder %s18, 0
      %p123 = por %p121, %p122
      %p124 = scmp.ne.s32.totalorder %s112, %s113
      %p125 = scmp.eq.s32.totalorder %s19, 1
      %p126 = por %p124, %p125
      %p128 = scmp.ne.s32.totalorder %s113, %s127
      %p129 = scmp.eq.s32.totalorder %s19, 0
      %p130 = por %p128, %p129
      %s131 = ssub.s32 %s13, %s20
      %p132 = scmp.eq.s32.totalorder %s131, 0
      %s134 = sadd.s32 %s133, 1
      %s135 = scalar_select %p132, %s133, %s134
      %p138 = pneg %p132
      %p139 = scmp.eq.s32.totalorder %s13, 1
      %p140 = por %p138, %p139
      %p141 = scmp.ne.s32.totalorder %s133, %s136
      %p142 = scmp.eq.s32.totalorder %s13, 0
      %p143 = por %p141, %p142
      %p144 = scmp.ne.s32.totalorder %s133, %s136
      %p145 = scmp.eq.s32.totalorder %s18, 1
      %p146 = por %p144, %p145
      %p147 = scmp.ne.s32.totalorder %s136, %s137
      %p148 = scmp.eq.s32.totalorder %s18, 0
      %p149 = por %p147, %p148
      %p150 = scmp.ne.s32.totalorder %s136, %s137
      %p151 = scmp.eq.s32.totalorder %s19, 1
      %p152 = por %p150, %p151
      %p154 = scmp.ne.s32.totalorder %s137, %s153
      %p155 = scmp.eq.s32.totalorder %s19, 0
      %p156 = por %p154, %p155
      %p157 = scmp.le.s32.totalorder 1, %s13
      %p158 = scmp.lt.s32.totalorder %s13, 3
      %p159 = pnand %p157, %p158
      %p160 = pneg %p159
      // Predicated region
      $region9: #{dgaze_pallas.1} parent=5 // pred_check
        _
      $region10: #{dgaze_pallas.1} parent=5 // pred_check_branch
        %162 = sbr.rel (%p159) target = $region12
      $region11: #{dgaze_pallas.1} parent=5 // pred_region
        %s163 = ssub.s32 %s13, 1
        // Predicated region
        $region13: #{dgaze_pallas.1} parent=11 // pred_check
          %p164 = pneg %p60
        $region14: #{dgaze_pallas.1} parent=11 // pred_check_branch
          %166 = sbr.rel (%p164) target = $region16
        $region15: #{dgaze_pallas.1} parent=11 // pred_region
          %s168 = ssub.s32 8192, 8192
          %169 = vsyncadd [#allocation3], %s168
          %s170 = sshll.u32 [#allocation2], 4
          %s171 = int_to_ptr.vmem [resolvable:$true] %s170
          %176 = dma.hbm_to_vmem [thread:$0]  %s1, 8192, %s171, [#allocation3], 512, 512, 32
        $region16: #{dgaze_pallas.1} parent=11 // pred_fallthru
          _
        // Predicated region
        $region17: #{dgaze_pallas.1} parent=11 // pred_check
          %p177 = pneg %p81
        $region18: #{dgaze_pallas.1} parent=11 // pred_check_branch
          %179 = sbr.rel (%p177) target = $region20
        $region19: #{dgaze_pallas.1} parent=11 // pred_region
          _
        $region20: #{dgaze_pallas.1} parent=11 // pred_fallthru
          _
        // Predicated region
        $region21: #{dgaze_pallas.1} parent=11 // pred_check
          %p180 = pneg %p102
        $region22: #{dgaze_pallas.1} parent=11 // pred_check_branch
          %182 = sbr.rel (%p180) target = $region24
        $region23: #{dgaze_pallas.1} parent=11 // pred_region
          %s184 = ssub.s32 6144, 6144
          %185 = vsyncadd [#allocation5], %s184
          %s186 = sshll.u32 [#allocation4], 4
          %s187 = int_to_ptr.vmem [resolvable:$true] %s186
          %192 = dma.hbm_to_vmem [thread:$0]  %s3, 6144, %s187, [#allocation5], 64, 64, 4
        $region24: #{dgaze_pallas.1} parent=11 // pred_fallthru
          _
        // Predicated region
        $region25: #{dgaze_pallas.1} parent=11 // pred_check
          %p193 = pneg %p123
        $region26: #{dgaze_pallas.1} parent=11 // pred_check_branch
          %195 = sbr.rel (%p193) target = $region28
        $region27: #{dgaze_pallas.1} parent=11 // pred_region
          _
        $region28: #{dgaze_pallas.1} parent=11 // pred_fallthru
          _
      $region12: #{dgaze_pallas.1} parent=5 // pred_fallthru
        _
      %p196 = scmp.lt.s32.totalorder %s13, 2
      // Predicated region
      $region29: #{dgaze_pallas.1} parent=5 // pred_check
        %p197 = pneg %p196
      $region30: #{dgaze_pallas.1} parent=5 // pred_check_branch
        %199 = sbr.rel (%p197) target = $region32
      $region31: #{dgaze_pallas.1} parent=5 // pred_region
        // Predicated region
        $region33: #{dgaze_pallas.1} parent=31 // pred_check
          %p200 = pneg %p33
        $region34: #{dgaze_pallas.1} parent=31 // pred_check_branch
          %202 = sbr.rel (%p200) target = $region36
        $region35: #{dgaze_pallas.1} parent=31 // pred_region
          %p203 = scmp.lt.s32.totalorder %s13, 1
          %s204 = scalar_select %p203, %s13, 1
          %s205 = smul.addr %s204, 8
          %s206 = scalar_lea.vmem %s0, %s205
        $region36: #{dgaze_pallas.1} parent=31 // pred_fallthru
          _
      $region32: #{dgaze_pallas.1} parent=5 // pred_fallthru
        _
      %p207 = scmp.le.s32.totalorder 1, %s13
      %p208 = scmp.lt.s32.totalorder %s13, 3
      %p209 = pnand %p207, %p208
      %p210 = pneg %p209
      // Predicated region
      $region37: #{dgaze_pallas.1} parent=5 // pred_check
        _
      $region38: #{dgaze_pallas.1} parent=5 // pred_check_branch
        %212 = sbr.rel (%p209) target = $region40
      $region39: #{dgaze_pallas.1} parent=5 // pred_region
        %s213 = ssub.s32 %s13, 1
        // Predicated region
        $region41: #{dgaze_pallas.1} parent=39 // pred_check
          %p214 = pneg %p60
        $region42: #{dgaze_pallas.1} parent=39 // pred_check_branch
          %216 = sbr.rel (%p214) target = $region44
        $region43: #{dgaze_pallas.1} parent=39 // pred_region
          %217 = dma.done [#allocation3], 8192
        $region44: #{dgaze_pallas.1} parent=39 // pred_fallthru
          _
        // Predicated region
        $region45: #{dgaze_pallas.1} parent=39 // pred_check
          %p218 = pneg %p102
        $region46: #{dgaze_pallas.1} parent=39 // pred_check_branch
          %220 = sbr.rel (%p218) target = $region48
        $region47: #{dgaze_pallas.1} parent=39 // pred_region
          %221 = dma.done [#allocation5], 6144
        $region48: #{dgaze_pallas.1} parent=39 // pred_fallthru
          _
        %p222 = scmp.lt.s32.totalorder %s18, 1
        %s223 = scalar_select %p222, %s18, 1
        %s224 = smul.addr %s223, 8
        %s225 = scalar_lea.vmem %s0, %s224
        %p226 = pneg %p39
        %p227 = pneg %p36
        %p228 = pneg %p60
        %p229 = pneg %p57
        %p230 = pneg %p81
        %p231 = pneg %p78
        %p232 = pneg %p102
        %p233 = pneg %p99
        %p234 = pneg %p123
        %p235 = pneg %p120
        %p236 = pneg %p149
        %p237 = pneg %p146
        %p238 = scmp.lt.s32.totalorder %s18, 1
        %s239 = scalar_select %p238, %s18, 1
        %s240 = smul.addr %s239, 8
        %s241 = scalar_lea.vmem %s5, %s240
        %p242 = scmp.lt.s32.totalorder %s18, 1
        %s243 = scalar_select %p242, %s18, 1
        %s244 = smul.addr %s243, 8
        %s245 = scalar_lea.vmem %s0, %s244
        %p246 = scmp.lt.s32.totalorder %s18, 1
        %s247 = scalar_select %p246, %s18, 1
        %s248 = smul.addr %s247, 8
        %s249 = scalar_lea.vmem %s5, %s248
        %v251 = vld [vmem:[%s245] sm:$0xff]
        %v252 = vpack.c.bf16 %v251, %v251
        %v253 = vld [vmem:[#allocation2] sm:$0xff]
        %v254 = vld [vmem:[#allocation2 + $0x8] sm:$0xff]
        %v255 = vld [vmem:[#allocation2 + $0x10] sm:$0xff]
        %v256 = vld [vmem:[#allocation2 + $0x18] sm:$0xff]
        %v257 = vld [vmem:[#allocation2 + $0x20] sm:$0xff]
        %v258 = vld [vmem:[#allocation2 + $0x28] sm:$0xff]
        %v259 = vld [vmem:[#allocation2 + $0x30] sm:$0xff]
        %v260 = vld [vmem:[#allocation2 + $0x38] sm:$0xff]
        %v261 = vld [vmem:[#allocation2 + $0x40] sm:$0xff]
        %v262 = vld [vmem:[#allocation2 + $0x48] sm:$0xff]
        %v263 = vld [vmem:[#allocation2 + $0x50] sm:$0xff]
        %v264 = vld [vmem:[#allocation2 + $0x58] sm:$0xff]
        %v265 = vld [vmem:[#allocation2 + $0x60] sm:$0xff]
        %v266 = vld [vmem:[#allocation2 + $0x68] sm:$0xff]
        %v267 = vld [vmem:[#allocation2 + $0x70] sm:$0xff]
        %v268 = vld [vmem:[#allocation2 + $0x78] sm:$0xff]
        %v269 = vld [vmem:[#allocation2 + $0x80] sm:$0xff]
        %v270 = vld [vmem:[#allocation2 + $0x88] sm:$0xff]
        %v271 = vld [vmem:[#allocation2 + $0x90] sm:$0xff]
        %v272 = vld [vmem:[#allocation2 + $0x98] sm:$0xff]
        %v273 = vld [vmem:[#allocation2 + $0xa0] sm:$0xff]
        %v274 = vld [vmem:[#allocation2 + $0xa8] sm:$0xff]
        %v275 = vld [vmem:[#allocation2 + $0xb0] sm:$0xff]
        %v276 = vld [vmem:[#allocation2 + $0xb8] sm:$0xff]
        %v277 = vld [vmem:[#allocation2 + $0xc0] sm:$0xff]
        %v278 = vld [vmem:[#allocation2 + $0xc8] sm:$0xff]
        %v279 = vld [vmem:[#allocation2 + $0xd0] sm:$0xff]
        %v280 = vld [vmem:[#allocation2 + $0xd8] sm:$0xff]
        %v281 = vld [vmem:[#allocation2 + $0xe0] sm:$0xff]
        %v282 = vld [vmem:[#allocation2 + $0xe8] sm:$0xff]
        %v283 = vld [vmem:[#allocation2 + $0xf0] sm:$0xff]
        %v284 = vld [vmem:[#allocation2 + $0xf8] sm:$0xff]
        %v285 = vld [vmem:[#allocation2 + $0x100] sm:$0xff]
        %v286 = vld [vmem:[#allocation2 + $0x108] sm:$0xff]
        %v287 = vld [vmem:[#allocation2 + $0x110] sm:$0xff]
        %v288 = vld [vmem:[#allocation2 + $0x118] sm:$0xff]
        %v289 = vld [vmem:[#allocation2 + $0x120] sm:$0xff]
        %v290 = vld [vmem:[#allocation2 + $0x128] sm:$0xff]
        %v291 = vld [vmem:[#allocation2 + $0x130] sm:$0xff]
        %v292 = vld [vmem:[#allocation2 + $0x138] sm:$0xff]
        %v293 = vld [vmem:[#allocation2 + $0x140] sm:$0xff]
        %v294 = vld [vmem:[#allocation2 + $0x148] sm:$0xff]
        %v295 = vld [vmem:[#allocation2 + $0x150] sm:$0xff]
        %v296 = vld [vmem:[#allocation2 + $0x158] sm:$0xff]
        %v297 = vld [vmem:[#allocation2 + $0x160] sm:$0xff]
        %v298 = vld [vmem:[#allocation2 + $0x168] sm:$0xff]
        %v299 = vld [vmem:[#allocation2 + $0x170] sm:$0xff]
        %v300 = vld [vmem:[#allocation2 + $0x178] sm:$0xff]
        %v301 = vld [vmem:[#allocation2 + $0x180] sm:$0xff]
        %v302 = vld [vmem:[#allocation2 + $0x188] sm:$0xff]
        %v303 = vld [vmem:[#allocation2 + $0x190] sm:$0xff]
        %v304 = vld [vmem:[#allocation2 + $0x198] sm:$0xff]
        %v305 = vld [vmem:[#allocation2 + $0x1a0] sm:$0xff]
        %v306 = vld [vmem:[#allocation2 + $0x1a8] sm:$0xff]
        %v307 = vld [vmem:[#allocation2 + $0x1b0] sm:$0xff]
        %v308 = vld [vmem:[#allocation2 + $0x1b8] sm:$0xff]
        %v309 = vld [vmem:[#allocation2 + $0x1c0] sm:$0xff]
        %v310 = vld [vmem:[#allocation2 + $0x1c8] sm:$0xff]
        %v311 = vld [vmem:[#allocation2 + $0x1d0] sm:$0xff]
        %v312 = vld [vmem:[#allocation2 + $0x1d8] sm:$0xff]
        %v313 = vld [vmem:[#allocation2 + $0x1e0] sm:$0xff]
        %v314 = vld [vmem:[#allocation2 + $0x1e8] sm:$0xff]
        %v315 = vld [vmem:[#allocation2 + $0x1f0] sm:$0xff]
        %v316 = vld [vmem:[#allocation2 + $0x1f8] sm:$0xff]
        %v317 = vld [vmem:[%s2] sm:$0xff]
        %v319 = vlaneseq
        %v320 = vshrl.u32 %v319, 7
        %v321 = vsub.s32 0, %v320
        %v322 = vrot.slane %v317, %v321
        %v323 = vlaneseq
        %v324 = vshrl.u32 %v323, 7
        %v325 = vsub.s32 1, %v324
        %v326 = vrot.slane %v317, %v325
        %v327 = vlaneseq
        %v328 = vshrl.u32 %v327, 7
        %v329 = vsub.s32 2, %v328
        %v330 = vrot.slane %v317, %v329
        %v331 = vlaneseq
        %v332 = vshrl.u32 %v331, 7
        %v333 = vsub.s32 3, %v332
        %v334 = vrot.slane %v317, %v333
        %v335 = vlaneseq
        %v336 = vshrl.u32 %v335, 7
        %v337 = vsub.s32 4, %v336
        %v338 = vrot.slane %v317, %v337
        %v339 = vlaneseq
        %v340 = vshrl.u32 %v339, 7
        %v341 = vsub.s32 5, %v340
        %v342 = vrot.slane %v317, %v341
        %v343 = vlaneseq
        %v344 = vshrl.u32 %v343, 7
        %v345 = vsub.s32 6, %v344
        %v346 = vrot.slane %v317, %v345
        %v347 = vlaneseq
        %v348 = vshrl.u32 %v347, 7
        %v349 = vsub.s32 7, %v348
        %v350 = vrot.slane %v317, %v349
        %v423 = vunpack.c.l.b16 %v253
        %v424 = vunpack.c.h.b16 %v253
        %v425 = vunpack.c.l.b16 %v254
        %v426 = vunpack.c.h.b16 %v254
        %v427 = vunpack.c.l.b16 %v255
        %v428 = vunpack.c.h.b16 %v255
        %v429 = vunpack.c.l.b16 %v256
        %v430 = vunpack.c.h.b16 %v256
        %v431 = vunpack.c.l.b16 %v257
        %v432 = vunpack.c.h.b16 %v257
        %v433 = vunpack.c.l.b16 %v258
        %v434 = vunpack.c.h.b16 %v258
        %v435 = vunpack.c.l.b16 %v259
        %v436 = vunpack.c.h.b16 %v259
        %v437 = vunpack.c.l.b16 %v260
        %v438 = vunpack.c.h.b16 %v260
        %v439 = vunpack.c.l.b16 %v261
        %v440 = vunpack.c.h.b16 %v261
        %v441 = vunpack.c.l.b16 %v262
        %v442 = vunpack.c.h.b16 %v262
        %v443 = vunpack.c.l.b16 %v263
        %v444 = vunpack.c.h.b16 %v263
        %v445 = vunpack.c.l.b16 %v264
        %v446 = vunpack.c.h.b16 %v264
        %v447 = vunpack.c.l.b16 %v265
        %v448 = vunpack.c.h.b16 %v265
        %v449 = vunpack.c.l.b16 %v266
        %v450 = vunpack.c.h.b16 %v266
        %v451 = vunpack.c.l.b16 %v267
        %v452 = vunpack.c.h.b16 %v267
        %v453 = vunpack.c.l.b16 %v268
        %v454 = vunpack.c.h.b16 %v268
        %v455 = vunpack.c.l.b16 %v269
        %v456 = vunpack.c.h.b16 %v269
        %v457 = vunpack.c.l.b16 %v270
        %v458 = vunpack.c.h.b16 %v270
        %v459 = vunpack.c.l.b16 %v271
        %v460 = vunpack.c.h.b16 %v271
        %v461 = vunpack.c.l.b16 %v272
        %v462 = vunpack.c.h.b16 %v272
        %v463 = vunpack.c.l.b16 %v273
        %v464 = vunpack.c.h.b16 %v273
        %v465 = vunpack.c.l.b16 %v274
        %v466 = vunpack.c.h.b16 %v274
        %v467 = vunpack.c.l.b16 %v275
        %v468 = vunpack.c.h.b16 %v275
        %v469 = vunpack.c.l.b16 %v276
        %v470 = vunpack.c.h.b16 %v276
        %v471 = vunpack.c.l.b16 %v277
        %v472 = vunpack.c.h.b16 %v277
        %v473 = vunpack.c.l.b16 %v278
        %v474 = vunpack.c.h.b16 %v278
        %v475 = vunpack.c.l.b16 %v279
        %v476 = vunpack.c.h.b16 %v279
        %v477 = vunpack.c.l.b16 %v280
        %v478 = vunpack.c.h.b16 %v280
        %v479 = vunpack.c.l.b16 %v281
        %v480 = vunpack.c.h.b16 %v281
        %v481 = vunpack.c.l.b16 %v282
        %v482 = vunpack.c.h.b16 %v282
        %v483 = vunpack.c.l.b16 %v283
        %v484 = vunpack.c.h.b16 %v283
        %v485 = vunpack.c.l.b16 %v284
        %v486 = vunpack.c.h.b16 %v284
        %v487 = vunpack.c.l.b16 %v285
        %v488 = vunpack.c.h.b16 %v285
        %v489 = vunpack.c.l.b16 %v286
        %v490 = vunpack.c.h.b16 %v286
        %v491 = vunpack.c.l.b16 %v287
        %v492 = vunpack.c.h.b16 %v287
        %v493 = vunpack.c.l.b16 %v288
        %v494 = vunpack.c.h.b16 %v288
        %v495 = vunpack.c.l.b16 %v289
        %v496 = vunpack.c.h.b16 %v289
        %v497 = vunpack.c.l.b16 %v290
        %v498 = vunpack.c.h.b16 %v290
        %v499 = vunpack.c.l.b16 %v291
        %v500 = vunpack.c.h.b16 %v291
        %v501 = vunpack.c.l.b16 %v292
        %v502 = vunpack.c.h.b16 %v292
        %v503 = vunpack.c.l.b16 %v293
        %v504 = vunpack.c.h.b16 %v293
        %v505 = vunpack.c.l.b16 %v294
        %v506 = vunpack.c.h.b16 %v294
        %v507 = vunpack.c.l.b16 %v295
        %v508 = vunpack.c.h.b16 %v295
        %v509 = vunpack.c.l.b16 %v296
        %v510 = vunpack.c.h.b16 %v296
        %v511 = vunpack.c.l.b16 %v297
        %v512 = vunpack.c.h.b16 %v297
        %v513 = vunpack.c.l.b16 %v298
        %v514 = vunpack.c.h.b16 %v298
        %v515 = vunpack.c.l.b16 %v299
        %v516 = vunpack.c.h.b16 %v299
        %v517 = vunpack.c.l.b16 %v300
        %v518 = vunpack.c.h.b16 %v300
        %v519 = vunpack.c.l.b16 %v301
        %v520 = vunpack.c.h.b16 %v301
        %v521 = vunpack.c.l.b16 %v302
        %v522 = vunpack.c.h.b16 %v302
        %v523 = vunpack.c.l.b16 %v303
        %v524 = vunpack.c.h.b16 %v303
        %v525 = vunpack.c.l.b16 %v304
        %v526 = vunpack.c.h.b16 %v304
        %v527 = vunpack.c.l.b16 %v305
        %v528 = vunpack.c.h.b16 %v305
        %v529 = vunpack.c.l.b16 %v306
        %v530 = vunpack.c.h.b16 %v306
        %v531 = vunpack.c.l.b16 %v307
        %v532 = vunpack.c.h.b16 %v307
        %v533 = vunpack.c.l.b16 %v308
        %v534 = vunpack.c.h.b16 %v308
        %v535 = vunpack.c.l.b16 %v309
        %v536 = vunpack.c.h.b16 %v309
        %v537 = vunpack.c.l.b16 %v310
        %v538 = vunpack.c.h.b16 %v310
        %v539 = vunpack.c.l.b16 %v311
        %v540 = vunpack.c.h.b16 %v311
        %v541 = vunpack.c.l.b16 %v312
        %v542 = vunpack.c.h.b16 %v312
        %v543 = vunpack.c.l.b16 %v313
        %v544 = vunpack.c.h.b16 %v313
        %v545 = vunpack.c.l.b16 %v314
        %v546 = vunpack.c.h.b16 %v314
        %v547 = vunpack.c.l.b16 %v315
        %v548 = vunpack.c.h.b16 %v315
        %v549 = vunpack.c.l.b16 %v316
        %v550 = vunpack.c.h.b16 %v316
        %v551 = vpack.c.b16 %v431, %v423
        %v552 = vpack.c.b16 %v432, %v424
        %v553 = vpack.c.b16 %v433, %v425
        %v554 = vpack.c.b16 %v434, %v426
        %v555 = vpack.c.b16 %v435, %v427
        %v556 = vpack.c.b16 %v436, %v428
        %v557 = vpack.c.b16 %v437, %v429
        %v558 = vpack.c.b16 %v438, %v430
        %v559 = vpack.c.b16 %v447, %v439
        %v560 = vpack.c.b16 %v448, %v440
        %v561 = vpack.c.b16 %v449, %v441
        %v562 = vpack.c.b16 %v450, %v442
        %v563 = vpack.c.b16 %v451, %v443
        %v564 = vpack.c.b16 %v452, %v444
        %v565 = vpack.c.b16 %v453, %v445
        %v566 = vpack.c.b16 %v454, %v446
        %v567 = vpack.c.b16 %v463, %v455
        %v568 = vpack.c.b16 %v464, %v456
        %v569 = vpack.c.b16 %v465, %v457
        %v570 = vpack.c.b16 %v466, %v458
        %v571 = vpack.c.b16 %v467, %v459
        %v572 = vpack.c.b16 %v468, %v460
        %v573 = vpack.c.b16 %v469, %v461
        %v574 = vpack.c.b16 %v470, %v462
        %v575 = vpack.c.b16 %v479, %v471
        %v576 = vpack.c.b16 %v480, %v472
        %v577 = vpack.c.b16 %v481, %v473
        %v578 = vpack.c.b16 %v482, %v474
        %v579 = vpack.c.b16 %v483, %v475
        %v580 = vpack.c.b16 %v484, %v476
        %v581 = vpack.c.b16 %v485, %v477
        %v582 = vpack.c.b16 %v486, %v478
        %v583 = vpack.c.b16 %v495, %v487
        %v584 = vpack.c.b16 %v496, %v488
        %v585 = vpack.c.b16 %v497, %v489
        %v586 = vpack.c.b16 %v498, %v490
        %v587 = vpack.c.b16 %v499, %v491
        %v588 = vpack.c.b16 %v500, %v492
        %v589 = vpack.c.b16 %v501, %v493
        %v590 = vpack.c.b16 %v502, %v494
        %v591 = vpack.c.b16 %v511, %v503
        %v592 = vpack.c.b16 %v512, %v504
        %v593 = vpack.c.b16 %v513, %v505
        %v594 = vpack.c.b16 %v514, %v506
        %v595 = vpack.c.b16 %v515, %v507
        %v596 = vpack.c.b16 %v516, %v508
        %v597 = vpack.c.b16 %v517, %v509
        %v598 = vpack.c.b16 %v518, %v510
        %v599 = vpack.c.b16 %v527, %v519
        %v600 = vpack.c.b16 %v528, %v520
        %v601 = vpack.c.b16 %v529, %v521
        %v602 = vpack.c.b16 %v530, %v522
        %v603 = vpack.c.b16 %v531, %v523
        %v604 = vpack.c.b16 %v532, %v524
        %v605 = vpack.c.b16 %v533, %v525
        %v606 = vpack.c.b16 %v534, %v526
        %v607 = vpack.c.b16 %v543, %v535
        %v608 = vpack.c.b16 %v544, %v536
        %v609 = vpack.c.b16 %v545, %v537
        %v610 = vpack.c.b16 %v546, %v538
        %v611 = vpack.c.b16 %v547, %v539
        %v612 = vpack.c.b16 %v548, %v540
        %v613 = vpack.c.b16 %v549, %v541
        %v614 = vpack.c.b16 %v550, %v542
        %679 = vmatprep.subr.bf16.mxu0 %v552
        %680 = vmatpush1.bf16.msra.mxu0 %v551
        %681 = vmatprep.subr.bf16.mxu0 %v560
        %682 = vmatpush1.bf16.msra.mxu0 %v559
        %683 = vmatprep.subr.bf16.mxu0 %v568
        %684 = vmatpush1.bf16.msra.mxu0 %v567
        %685 = vmatprep.subr.bf16.mxu0 %v576
        %686 = vmatpush1.bf16.msra.mxu0 %v575
        %687 = vmatprep.subr.bf16.mxu0 %v584
        %688 = vmatpush1.bf16.msra.mxu0 %v583
        %689 = vmatprep.subr.bf16.mxu0 %v592
        %690 = vmatpush1.bf16.msra.mxu0 %v591
        %691 = vmatprep.subr.bf16.mxu0 %v600
        %692 = vmatpush1.bf16.msra.mxu0 %v599
        %693 = vmatprep.subr.bf16.mxu0 %v608
        %694 = vmatpush1.bf16.msra.mxu0 %v607
        %695 = vmatprep.subr.bf16.mxu0 0
        %696 = vmatpush1.bf16.msra.mxu0 0
        %697 = vmatprep.subr.bf16.mxu0 0
        %698 = vmatpush1.bf16.msra.mxu0 0
        %699 = vmatprep.subr.bf16.mxu0 0
        %700 = vmatpush1.bf16.msra.mxu0 0
        %701 = vmatprep.subr.bf16.mxu0 0
        %702 = vmatpush1.bf16.msra.mxu0 0
        %703 = vmatprep.subr.bf16.mxu0 0
        %704 = vmatpush1.bf16.msra.mxu0 0
        %705 = vmatprep.subr.bf16.mxu0 0
        %706 = vmatpush1.bf16.msra.mxu0 0
        %707 = vmatprep.subr.bf16.mxu0 0
        %708 = vmatpush1.bf16.msra.mxu0 0
        %709 = vmatprep.subr.bf16.mxu0 0
        %710 = vmatpush1.bf16.msra.mxu0 0
        %711 = vmatprep.mubr.bf16.mxu0 0
        %712 = vmatmul.mubr.bf16.gmra.mrb[0].mxu0 %v252
        %v713 = vpop.f32.mrb[0].mxu0
        %v714 = vadd.f32 %v322, %v713
        %v715 = vpop.f32.mrb[0].mxu0
        %v716 = vadd.f32 %v326, %v715
        %v717 = vpop.f32.mrb[0].mxu0
        %v718 = vpop.f32.mrb[0].mxu0
        %719 = vdwg.mxu0
        %720 = vmatprep.subr.bf16.mxu0 %v554
        %721 = vmatpush1.bf16.msra.mxu0 %v553
        %722 = vmatprep.subr.bf16.mxu0 %v562
        %723 = vmatpush1.bf16.msra.mxu0 %v561
        %724 = vmatprep.subr.bf16.mxu0 %v570
        %725 = vmatpush1.bf16.msra.mxu0 %v569
        %726 = vmatprep.subr.bf16.mxu0 %v578
        %727 = vmatpush1.bf16.msra.mxu0 %v577
        %728 = vmatprep.subr.bf16.mxu0 %v586
        %729 = vmatpush1.bf16.msra.mxu0 %v585
        %730 = vmatprep.subr.bf16.mxu0 %v594
        %731 = vmatpush1.bf16.msra.mxu0 %v593
        %732 = vmatprep.subr.bf16.mxu0 %v602
        %733 = vmatpush1.bf16.msra.mxu0 %v601
        %734 = vmatprep.subr.bf16.mxu0 %v610
        %735 = vmatpush1.bf16.msra.mxu0 %v609
        %736 = vmatprep.subr.bf16.mxu0 0
        %737 = vmatpush1.bf16.msra.mxu0 0
        %738 = vmatprep.subr.bf16.mxu0 0
        %739 = vmatpush1.bf16.msra.mxu0 0
        %740 = vmatprep.subr.bf16.mxu0 0
        %741 = vmatpush1.bf16.msra.mxu0 0
        %742 = vmatprep.subr.bf16.mxu0 0
        %743 = vmatpush1.bf16.msra.mxu0 0
        %744 = vmatprep.subr.bf16.mxu0 0
        %745 = vmatpush1.bf16.msra.mxu0 0
        %746 = vmatprep.subr.bf16.mxu0 0
        %747 = vmatpush1.bf16.msra.mxu0 0
        %748 = vmatprep.subr.bf16.mxu0 0
        %749 = vmatpush1.bf16.msra.mxu0 0
        %750 = vmatprep.subr.bf16.mxu0 0
        %751 = vmatpush1.bf16.msra.mxu0 0
        %752 = vmatprep.mubr.bf16.mxu0 0
        %753 = vmatmul.mubr.bf16.gmra.mrb[0].mxu0 %v252
        %v754 = vpop.f32.mrb[0].mxu0
        %v755 = vadd.f32 %v330, %v754
        %v756 = vpop.f32.mrb[0].mxu0
        %v757 = vadd.f32 %v334, %v756
        %v758 = vpop.f32.mrb[0].mxu0
        %v759 = vpop.f32.mrb[0].mxu0
        %760 = vdwg.mxu0
        %761 = vmatprep.subr.bf16.mxu0 %v556
        %762 = vmatpush1.bf16.msra.mxu0 %v555
        %763 = vmatprep.subr.bf16.mxu0 %v564
        %764 = vmatpush1.bf16.msra.mxu0 %v563
        %765 = vmatprep.subr.bf16.mxu0 %v572
        %766 = vmatpush1.bf16.msra.mxu0 %v571
        %767 = vmatprep.subr.bf16.mxu0 %v580
        %768 = vmatpush1.bf16.msra.mxu0 %v579
        %769 = vmatprep.subr.bf16.mxu0 %v588
        %770 = vmatpush1.bf16.msra.mxu0 %v587
        %771 = vmatprep.subr.bf16.mxu0 %v596
        %772 = vmatpush1.bf16.msra.mxu0 %v595
        %773 = vmatprep.subr.bf16.mxu0 %v604
        %774 = vmatpush1.bf16.msra.mxu0 %v603
        %775 = vmatprep.subr.bf16.mxu0 %v612
        %776 = vmatpush1.bf16.msra.mxu0 %v611
        %777 = vmatprep.subr.bf16.mxu0 0
        %778 = vmatpush1.bf16.msra.mxu0 0
        %779 = vmatprep.subr.bf16.mxu0 0
        %780 = vmatpush1.bf16.msra.mxu0 0
        %781 = vmatprep.subr.bf16.mxu0 0
        %782 = vmatpush1.bf16.msra.mxu0 0
        %783 = vmatprep.subr.bf16.mxu0 0
        %784 = vmatpush1.bf16.msra.mxu0 0
        %785 = vmatprep.subr.bf16.mxu0 0
        %786 = vmatpush1.bf16.msra.mxu0 0
        %787 = vmatprep.subr.bf16.mxu0 0
        %788 = vmatpush1.bf16.msra.mxu0 0
        %789 = vmatprep.subr.bf16.mxu0 0
        %790 = vmatpush1.bf16.msra.mxu0 0
        %791 = vmatprep.subr.bf16.mxu0 0
        %792 = vmatpush1.bf16.msra.mxu0 0
        %793 = vmatprep.mubr.bf16.mxu0 0
        %794 = vmatmul.mubr.bf16.gmra.mrb[0].mxu0 %v252
        %v795 = vpop.f32.mrb[0].mxu0
        %v796 = vadd.f32 %v338, %v795
        %v797 = vpop.f32.mrb[0].mxu0
        %v798 = vadd.f32 %v342, %v797
        %v799 = vpop.f32.mrb[0].mxu0
        %v800 = vpop.f32.mrb[0].mxu0
        %801 = vdwg.mxu0
        %802 = vmatprep.subr.bf16.mxu0 %v558
        %803 = vmatpush1.bf16.msra.mxu0 %v557
        %804 = vmatprep.subr.bf16.mxu0 %v566
        %805 = vmatpush1.bf16.msra.mxu0 %v565
        %806 = vmatprep.subr.bf16.mxu0 %v574
        %807 = vmatpush1.bf16.msra.mxu0 %v573
        %808 = vmatprep.subr.bf16.mxu0 %v582
        %809 = vmatpush1.bf16.msra.mxu0 %v581
        %810 = vmatprep.subr.bf16.mxu0 %v590
        %811 = vmatpush1.bf16.msra.mxu0 %v589
        %812 = vmatprep.subr.bf16.mxu0 %v598
        %813 = vmatpush1.bf16.msra.mxu0 %v597
        %814 = vmatprep.subr.bf16.mxu0 %v606
        %815 = vmatpush1.bf16.msra.mxu0 %v605
        %816 = vmatprep.subr.bf16.mxu0 %v614
        %817 = vmatpush1.bf16.msra.mxu0 %v613
        %818 = vmatprep.subr.bf16.mxu0 0
        %819 = vmatpush1.bf16.msra.mxu0 0
        %820 = vmatprep.subr.bf16.mxu0 0
        %821 = vmatpush1.bf16.msra.mxu0 0
        %822 = vmatprep.subr.bf16.mxu0 0
        %823 = vmatpush1.bf16.msra.mxu0 0
        %824 = vmatprep.subr.bf16.mxu0 0
        %825 = vmatpush1.bf16.msra.mxu0 0
        %826 = vmatprep.subr.bf16.mxu0 0
        %827 = vmatpush1.bf16.msra.mxu0 0
        %828 = vmatprep.subr.bf16.mxu0 0
        %829 = vmatpush1.bf16.msra.mxu0 0
        %830 = vmatprep.subr.bf16.mxu0 0
        %831 = vmatpush1.bf16.msra.mxu0 0
        %832 = vmatprep.subr.bf16.mxu0 0
        %833 = vmatpush1.bf16.msra.mxu0 0
        %834 = vmatprep.mubr.bf16.mxu0 0
        %835 = vmatmul.mubr.bf16.gmra.mrb[0].mxu0 %v252
        %v836 = vpop.f32.mrb[0].mxu0
        %v837 = vadd.f32 %v346, %v836
        %v838 = vpop.f32.mrb[0].mxu0
        %v839 = vadd.f32 %v350, %v838
        %v840 = vpop.f32.mrb[0].mxu0
        %v841 = vpop.f32.mrb[0].mxu0
        %842 = vdwg.mxu0
        %v843 = vmax.f32 %v714, 0.0
        %v844 = vmax.f32 %v716, 0.0
        %v845 = vmax.f32 %v755, 0.0
        %v846 = vmax.f32 %v757, 0.0
        %v847 = vmax.f32 %v796, 0.0
        %v848 = vmax.f32 %v798, 0.0
        %v849 = vmax.f32 %v837, 0.0
        %v850 = vmax.f32 %v839, 0.0
        %v851 = vmax.f32 %v843, %v847
        %v852 = vmax.f32 %v844, %v848
        %v853 = vmax.f32 %v845, %v849
        %v854 = vmax.f32 %v846, %v850
        %v855 = vpack.c.bf16 %v851, %v851
        %v856 = vpack.c.bf16 %v852, %v852
        %v857 = vpack.c.bf16 %v853, %v853
        %v858 = vpack.c.bf16 %v854, %v854
        %v859 = vld [vmem:[#allocation4] sm:$0xf]
        %v860 = vld [vmem:[#allocation4 + $0x4] sm:$0xf]
        %v861 = vld [vmem:[#allocation4 + $0x8] sm:$0xf]
        %v862 = vld [vmem:[#allocation4 + $0xc] sm:$0xf]
        %v863 = vld [vmem:[#allocation4 + $0x10] sm:$0xf]
        %v864 = vld [vmem:[#allocation4 + $0x14] sm:$0xf]
        %v865 = vld [vmem:[#allocation4 + $0x18] sm:$0xf]
        %v866 = vld [vmem:[#allocation4 + $0x1c] sm:$0xf]
        %v867 = vld [vmem:[#allocation4 + $0x20] sm:$0xf]
        %v868 = vld [vmem:[#allocation4 + $0x24] sm:$0xf]
        %v869 = vld [vmem:[#allocation4 + $0x28] sm:$0xf]
        %v870 = vld [vmem:[#allocation4 + $0x2c] sm:$0xf]
        %v871 = vld [vmem:[#allocation4 + $0x30] sm:$0xf]
        %v872 = vld [vmem:[#allocation4 + $0x34] sm:$0xf]
        %v873 = vld [vmem:[#allocation4 + $0x38] sm:$0xf]
        %v874 = vld [vmem:[#allocation4 + $0x3c] sm:$0xf]
        %v875 = vld [vmem:[#allocation4 + $0x40] sm:$0xf]
        %v876 = vld [vmem:[#allocation4 + $0x44] sm:$0xf]
        %v877 = vld [vmem:[#allocation4 + $0x48] sm:$0xf]
        %v878 = vld [vmem:[#allocation4 + $0x4c] sm:$0xf]
        %v879 = vld [vmem:[#allocation4 + $0x50] sm:$0xf]
        %v880 = vld [vmem:[#allocation4 + $0x54] sm:$0xf]
        %v881 = vld [vmem:[#allocation4 + $0x58] sm:$0xf]
        %v882 = vld [vmem:[#allocation4 + $0x5c] sm:$0xf]
        %v883 = vld [vmem:[#allocation4 + $0x60] sm:$0xf]
        %v884 = vld [vmem:[#allocation4 + $0x64] sm:$0xf]
        %v885 = vld [vmem:[#allocation4 + $0x68] sm:$0xf]
        %v886 = vld [vmem:[#allocation4 + $0x6c] sm:$0xf]
        %v887 = vld [vmem:[#allocation4 + $0x70] sm:$0xf]
        %v888 = vld [vmem:[#allocation4 + $0x74] sm:$0xf]
        %v889 = vld [vmem:[#allocation4 + $0x78] sm:$0xf]
        %v890 = vld [vmem:[#allocation4 + $0x7c] sm:$0xf]
        %v891 = vld [vmem:[#allocation4 + $0x80] sm:$0xf]
        %v892 = vld [vmem:[#allocation4 + $0x84] sm:$0xf]
        %v893 = vld [vmem:[#allocation4 + $0x88] sm:$0xf]
        %v894 = vld [vmem:[#allocation4 + $0x8c] sm:$0xf]
        %v895 = vld [vmem:[#allocation4 + $0x90] sm:$0xf]
        %v896 = vld [vmem:[#allocation4 + $0x94] sm:$0xf]
        %v897 = vld [vmem:[#allocation4 + $0x98] sm:$0xf]
        %v898 = vld [vmem:[#allocation4 + $0x9c] sm:$0xf]
        %v899 = vld [vmem:[#allocation4 + $0xa0] sm:$0xf]
        %v900 = vld [vmem:[#allocation4 + $0xa4] sm:$0xf]
        %v901 = vld [vmem:[#allocation4 + $0xa8] sm:$0xf]
        %v902 = vld [vmem:[#allocation4 + $0xac] sm:$0xf]
        %v903 = vld [vmem:[#allocation4 + $0xb0] sm:$0xf]
        %v904 = vld [vmem:[#allocation4 + $0xb4] sm:$0xf]
        %v905 = vld [vmem:[#allocation4 + $0xb8] sm:$0xf]
        %v906 = vld [vmem:[#allocation4 + $0xbc] sm:$0xf]
        %v907 = vld [vmem:[#allocation4 + $0xc0] sm:$0xf]
        %v908 = vld [vmem:[#allocation4 + $0xc4] sm:$0xf]
        %v909 = vld [vmem:[#allocation4 + $0xc8] sm:$0xf]
        %v910 = vld [vmem:[#allocation4 + $0xcc] sm:$0xf]
        %v911 = vld [vmem:[#allocation4 + $0xd0] sm:$0xf]
        %v912 = vld [vmem:[#allocation4 + $0xd4] sm:$0xf]
        %v913 = vld [vmem:[#allocation4 + $0xd8] sm:$0xf]
        %v914 = vld [vmem:[#allocation4 + $0xdc] sm:$0xf]
        %v915 = vld [vmem:[#allocation4 + $0xe0] sm:$0xf]
        %v916 = vld [vmem:[#allocation4 + $0xe4] sm:$0xf]
        %v917 = vld [vmem:[#allocation4 + $0xe8] sm:$0xf]
        %v918 = vld [vmem:[#allocation4 + $0xec] sm:$0xf]
        %v919 = vld [vmem:[#allocation4 + $0xf0] sm:$0xf]
        %v920 = vld [vmem:[#allocation4 + $0xf4] sm:$0xf]
        %v921 = vld [vmem:[#allocation4 + $0xf8] sm:$0xf]
        %v922 = vld [vmem:[#allocation4 + $0xfc] sm:$0xf]
        %v923 = vld [vmem:[%s4] sm:$0x1]
        %v924 = vlaneseq
        %v925 = vshrl.u32 %v924, 7
        %v926 = vsub.s32 0, %v925
        %v927 = vrot.slane %v923, %v926
        %v992 = vunpack.c.l.b16 %v859
        %v993 = vunpack.c.l.b16 %v860
        %v994 = vunpack.c.l.b16 %v861
        %v995 = vunpack.c.l.b16 %v862
        %v996 = vunpack.c.l.b16 %v863
        %v997 = vunpack.c.l.b16 %v864
        %v998 = vunpack.c.l.b16 %v865
        %v999 = vunpack.c.l.b16 %v866
        %v1000 = vunpack.c.l.b16 %v867
        %v1001 = vunpack.c.l.b16 %v868
        %v1002 = vunpack.c.l.b16 %v869
        %v1003 = vunpack.c.l.b16 %v870
        %v1004 = vunpack.c.l.b16 %v871
        %v1005 = vunpack.c.l.b16 %v872
        %v1006 = vunpack.c.l.b16 %v873
        %v1007 = vunpack.c.l.b16 %v874
        %v1008 = vunpack.c.l.b16 %v875
        %v1009 = vunpack.c.l.b16 %v876
        %v1010 = vunpack.c.l.b16 %v877
        %v1011 = vunpack.c.l.b16 %v878
        %v1012 = vunpack.c.l.b16 %v879
        %v1013 = vunpack.c.l.b16 %v880
        %v1014 = vunpack.c.l.b16 %v881
        %v1015 = vunpack.c.l.b16 %v882
        %v1016 = vunpack.c.l.b16 %v883
        %v1017 = vunpack.c.l.b16 %v884
        %v1018 = vunpack.c.l.b16 %v885
        %v1019 = vunpack.c.l.b16 %v886
        %v1020 = vunpack.c.l.b16 %v887
        %v1021 = vunpack.c.l.b16 %v888
        %v1022 = vunpack.c.l.b16 %v889
        %v1023 = vunpack.c.l.b16 %v890
        %v1024 = vunpack.c.l.b16 %v891
        %v1025 = vunpack.c.l.b16 %v892
        %v1026 = vunpack.c.l.b16 %v893
        %v1027 = vunpack.c.l.b16 %v894
        %v1028 = vunpack.c.l.b16 %v895
        %v1029 = vunpack.c.l.b16 %v896
        %v1030 = vunpack.c.l.b16 %v897
        %v1031 = vunpack.c.l.b16 %v898
        %v1032 = vunpack.c.l.b16 %v899
        %v1033 = vunpack.c.l.b16 %v900
        %v1034 = vunpack.c.l.b16 %v901
        %v1035 = vunpack.c.l.b16 %v902
        %v1036 = vunpack.c.l.b16 %v903
        %v1037 = vunpack.c.l.b16 %v904
        %v1038 = vunpack.c.l.b16 %v905
        %v1039 = vunpack.c.l.b16 %v906
        %v1040 = vunpack.c.l.b16 %v907
        %v1041 = vunpack.c.l.b16 %v908
        %v1042 = vunpack.c.l.b16 %v909
        %v1043 = vunpack.c.l.b16 %v910
        %v1044 = vunpack.c.l.b16 %v911
        %v1045 = vunpack.c.l.b16 %v912
        %v1046 = vunpack.c.l.b16 %v913
        %v1047 = vunpack.c.l.b16 %v914
        %v1048 = vunpack.c.l.b16 %v915
        %v1049 = vunpack.c.l.b16 %v916
        %v1050 = vunpack.c.l.b16 %v917
        %v1051 = vunpack.c.l.b16 %v918
        %v1052 = vunpack.c.l.b16 %v919
        %v1053 = vunpack.c.l.b16 %v920
        %v1054 = vunpack.c.l.b16 %v921
        %v1055 = vunpack.c.l.b16 %v922
        %v1056 = vpack.c.b16 %v993, %v992
        %v1057 = vpack.c.b16 %v995, %v994
        %v1058 = vpack.c.b16 %v997, %v996
        %v1059 = vpack.c.b16 %v999, %v998
        %v1060 = vpack.c.b16 %v1001, %v1000
        %v1061 = vpack.c.b16 %v1003, %v1002
        %v1062 = vpack.c.b16 %v1005, %v1004
        %v1063 = vpack.c.b16 %v1007, %v1006
        %v1064 = vpack.c.b16 %v1009, %v1008
        %v1065 = vpack.c.b16 %v1011, %v1010
        %v1066 = vpack.c.b16 %v1013, %v1012
        %v1067 = vpack.c.b16 %v1015, %v1014
        %v1068 = vpack.c.b16 %v1017, %v1016
        %v1069 = vpack.c.b16 %v1019, %v1018
        %v1070 = vpack.c.b16 %v1021, %v1020
        %v1071 = vpack.c.b16 %v1023, %v1022
        %v1072 = vpack.c.b16 %v1025, %v1024
        %v1073 = vpack.c.b16 %v1027, %v1026
        %v1074 = vpack.c.b16 %v1029, %v1028
        %v1075 = vpack.c.b16 %v1031, %v1030
        %v1076 = vpack.c.b16 %v1033, %v1032
        %v1077 = vpack.c.b16 %v1035, %v1034
        %v1078 = vpack.c.b16 %v1037, %v1036
        %v1079 = vpack.c.b16 %v1039, %v1038
        %v1080 = vpack.c.b16 %v1041, %v1040
        %v1081 = vpack.c.b16 %v1043, %v1042
        %v1082 = vpack.c.b16 %v1045, %v1044
        %v1083 = vpack.c.b16 %v1047, %v1046
        %v1084 = vpack.c.b16 %v1049, %v1048
        %v1085 = vpack.c.b16 %v1051, %v1050
        %v1086 = vpack.c.b16 %v1053, %v1052
        %v1087 = vpack.c.b16 %v1055, %v1054
        %1120 = vmatprep.subr.bf16.mxu0 0
        %1121 = vmatpush1.bf16.msra.mxu0 %v1056
        %1122 = vmatprep.subr.bf16.mxu0 0
        %1123 = vmatpush1.bf16.msra.mxu0 %v1057
        %1124 = vmatprep.subr.bf16.mxu0 0
        %1125 = vmatpush1.bf16.msra.mxu0 %v1058
        %1126 = vmatprep.subr.bf16.mxu0 0
        %1127 = vmatpush1.bf16.msra.mxu0 %v1059
        %1128 = vmatprep.subr.bf16.mxu0 0
        %1129 = vmatpush1.bf16.msra.mxu0 %v1060
        %1130 = vmatprep.subr.bf16.mxu0 0
        %1131 = vmatpush1.bf16.msra.mxu0 %v1061
        %1132 = vmatprep.subr.bf16.mxu0 0
        %1133 = vmatpush1.bf16.msra.mxu0 %v1062
        %1134 = vmatprep.subr.bf16.mxu0 0
        %1135 = vmatpush1.bf16.msra.mxu0 %v1063
        %1136 = vmatprep.subr.bf16.mxu0 0
        %1137 = vmatpush1.bf16.msra.mxu0 %v1064
        %1138 = vmatprep.subr.bf16.mxu0 0
        %1139 = vmatpush1.bf16.msra.mxu0 %v1065
        %1140 = vmatprep.subr.bf16.mxu0 0
        %1141 = vmatpush1.bf16.msra.mxu0 %v1066
        %1142 = vmatprep.subr.bf16.mxu0 0
        %1143 = vmatpush1.bf16.msra.mxu0 %v1067
        %1144 = vmatprep.subr.bf16.mxu0 0
        %1145 = vmatpush1.bf16.msra.mxu0 %v1068
        %1146 = vmatprep.subr.bf16.mxu0 0
        %1147 = vmatpush1.bf16.msra.mxu0 %v1069
        %1148 = vmatprep.subr.bf16.mxu0 0
        %1149 = vmatpush1.bf16.msra.mxu0 %v1070
        %1150 = vmatprep.subr.bf16.mxu0 0
        %1151 = vmatpush1.bf16.msra.mxu0 %v1071
        %1152 = vmatprep.mubr.bf16.mxu0 %v856
        %1153 = vmatmul.mubr.bf16.gmra.mrb[0].mxu0 %v855
        %v1154 = vpop.f32.mrb[0].mxu0
        %v1155 = vadd.f32 %v927, %v1154
        %v1156 = vpop.f32.mrb[0].mxu0
        %v1157 = vpop.f32.mrb[0].mxu0
        %v1158 = vpop.f32.mrb[0].mxu0
        %1159 = vdwg.mxu0
        %1160 = vmatprep.subr.bf16.mxu0 0
        %1161 = vmatpush1.bf16.msra.mxu0 %v1072
        %1162 = vmatprep.subr.bf16.mxu0 0
        %1163 = vmatpush1.bf16.msra.mxu0 %v1073
        %1164 = vmatprep.subr.bf16.mxu0 0
        %1165 = vmatpush1.bf16.msra.mxu0 %v1074
        %1166 = vmatprep.subr.bf16.mxu0 0
        %1167 = vmatpush1.bf16.msra.mxu0 %v1075
        %1168 = vmatprep.subr.bf16.mxu0 0
        %1169 = vmatpush1.bf16.msra.mxu0 %v1076
        %1170 = vmatprep.subr.bf16.mxu0 0
        %1171 = vmatpush1.bf16.msra.mxu0 %v1077
        %1172 = vmatprep.subr.bf16.mxu0 0
        %1173 = vmatpush1.bf16.msra.mxu0 %v1078
        %1174 = vmatprep.subr.bf16.mxu0 0
        %1175 = vmatpush1.bf16.msra.mxu0 %v1079
        %1176 = vmatprep.subr.bf16.mxu0 0
        %1177 = vmatpush1.bf16.msra.mxu0 %v1080
        %1178 = vmatprep.subr.bf16.mxu0 0
        %1179 = vmatpush1.bf16.msra.mxu0 %v1081
        %1180 = vmatprep.subr.bf16.mxu0 0
        %1181 = vmatpush1.bf16.msra.mxu0 %v1082
        %1182 = vmatprep.subr.bf16.mxu0 0
        %1183 = vmatpush1.bf16.msra.mxu0 %v1083
        %1184 = vmatprep.subr.bf16.mxu0 0
        %1185 = vmatpush1.bf16.msra.mxu0 %v1084
        %1186 = vmatprep.subr.bf16.mxu0 0
        %1187 = vmatpush1.bf16.msra.mxu0 %v1085
        %1188 = vmatprep.subr.bf16.mxu0 0
        %1189 = vmatpush1.bf16.msra.mxu0 %v1086
        %1190 = vmatprep.subr.bf16.mxu0 0
        %1191 = vmatpush1.bf16.msra.mxu0 %v1087
        %1192 = vmatprep.mubr.bf16.mxu0 %v858
        %1193 = vmatmul.mubr.bf16.gmra.mrb[0].mxu0 %v857
        %v1194 = vpop.f32.mrb[0].mxu0
        %v1195 = vadd.f32 %v1155, %v1194
        %v1196 = vpop.f32.mrb[0].mxu0
        %v1197 = vpop.f32.mrb[0].mxu0
        %v1198 = vpop.f32.mrb[0].mxu0
        %1199 = vdwg.mxu0
        %v1200 = vmax.f32 %v1195, 0.0
        %v1201 = vpack.c.bf16 %v1200, %v1200
        %v1202 = vld [vmem:[#allocation4 + $0x100] sm:$0xf]
        %v1203 = vld [vmem:[#allocation4 + $0x104] sm:$0xf]
        %v1204 = vld [vmem:[#allocation4 + $0x108] sm:$0xf]
        %v1205 = vld [vmem:[#allocation4 + $0x10c] sm:$0xf]
        %v1206 = vld [vmem:[#allocation4 + $0x110] sm:$0xf]
        %v1207 = vld [vmem:[#allocation4 + $0x114] sm:$0xf]
        %v1208 = vld [vmem:[#allocation4 + $0x118] sm:$0xf]
        %v1209 = vld [vmem:[#allocation4 + $0x11c] sm:$0xf]
        %v1210 = vld [vmem:[#allocation4 + $0x120] sm:$0xf]
        %v1211 = vld [vmem:[#allocation4 + $0x124] sm:$0xf]
        %v1212 = vld [vmem:[#allocation4 + $0x128] sm:$0xf]
        %v1213 = vld [vmem:[#allocation4 + $0x12c] sm:$0xf]
        %v1214 = vld [vmem:[#allocation4 + $0x130] sm:$0xf]
        %v1215 = vld [vmem:[#allocation4 + $0x134] sm:$0xf]
        %v1216 = vld [vmem:[#allocation4 + $0x138] sm:$0xf]
        %v1217 = vld [vmem:[#allocation4 + $0x13c] sm:$0xf]
        %v1218 = vld [vmem:[%s4 + $0x1] sm:$0x1]
        %v1219 = vlaneseq
        %v1220 = vshrl.u32 %v1219, 7
        %v1221 = vsub.s32 0, %v1220
        %v1222 = vrot.slane %v1218, %v1221
        %v1239 = vunpack.c.l.b16 %v1202
        %v1240 = vunpack.c.l.b16 %v1203
        %v1241 = vunpack.c.l.b16 %v1204
        %v1242 = vunpack.c.l.b16 %v1205
        %v1243 = vunpack.c.l.b16 %v1206
        %v1244 = vunpack.c.l.b16 %v1207
        %v1245 = vunpack.c.l.b16 %v1208
        %v1246 = vunpack.c.l.b16 %v1209
        %v1247 = vunpack.c.l.b16 %v1210
        %v1248 = vunpack.c.l.b16 %v1211
        %v1249 = vunpack.c.l.b16 %v1212
        %v1250 = vunpack.c.l.b16 %v1213
        %v1251 = vunpack.c.l.b16 %v1214
        %v1252 = vunpack.c.l.b16 %v1215
        %v1253 = vunpack.c.l.b16 %v1216
        %v1254 = vunpack.c.l.b16 %v1217
        %v1255 = vpack.c.b16 %v1240, %v1239
        %v1256 = vpack.c.b16 %v1242, %v1241
        %v1257 = vpack.c.b16 %v1244, %v1243
        %v1258 = vpack.c.b16 %v1246, %v1245
        %v1259 = vpack.c.b16 %v1248, %v1247
        %v1260 = vpack.c.b16 %v1250, %v1249
        %v1261 = vpack.c.b16 %v1252, %v1251
        %v1262 = vpack.c.b16 %v1254, %v1253
        %1271 = vmatprep.subr.bf16.mxu0 0
        %1272 = vmatpush1.bf16.msra.mxu0 %v1255
        %1273 = vmatprep.subr.bf16.mxu0 0
        %1274 = vmatpush1.bf16.msra.mxu0 %v1256
        %1275 = vmatprep.subr.bf16.mxu0 0
        %1276 = vmatpush1.bf16.msra.mxu0 %v1257
        %1277 = vmatprep.subr.bf16.mxu0 0
        %1278 = vmatpush1.bf16.msra.mxu0 %v1258
        %1279 = vmatprep.subr.bf16.mxu0 0
        %1280 = vmatpush1.bf16.msra.mxu0 %v1259
        %1281 = vmatprep.subr.bf16.mxu0 0
        %1282 = vmatpush1.bf16.msra.mxu0 %v1260
        %1283 = vmatprep.subr.bf16.mxu0 0
        %1284 = vmatpush1.bf16.msra.mxu0 %v1261
        %1285 = vmatprep.subr.bf16.mxu0 0
        %1286 = vmatpush1.bf16.msra.mxu0 %v1262
        %1287 = vmatprep.subr.bf16.mxu0 0
        %1288 = vmatpush1.bf16.msra.mxu0 0
        %1289 = vmatprep.subr.bf16.mxu0 0
        %1290 = vmatpush1.bf16.msra.mxu0 0
        %1291 = vmatprep.subr.bf16.mxu0 0
        %1292 = vmatpush1.bf16.msra.mxu0 0
        %1293 = vmatprep.subr.bf16.mxu0 0
        %1294 = vmatpush1.bf16.msra.mxu0 0
        %1295 = vmatprep.subr.bf16.mxu0 0
        %1296 = vmatpush1.bf16.msra.mxu0 0
        %1297 = vmatprep.subr.bf16.mxu0 0
        %1298 = vmatpush1.bf16.msra.mxu0 0
        %1299 = vmatprep.subr.bf16.mxu0 0
        %1300 = vmatpush1.bf16.msra.mxu0 0
        %1301 = vmatprep.subr.bf16.mxu0 0
        %1302 = vmatpush1.bf16.msra.mxu0 0
        %1303 = vmatprep.mubr.bf16.mxu0 0
        %1304 = vmatmul.mubr.bf16.gmra.mrb[0].mxu0 %v1201
        %v1305 = vpop.f32.mrb[0].mxu0
        %v1306 = vadd.f32 %v1222, %v1305
        %v1307 = vpop.f32.mrb[0].mxu0
        %v1308 = vpop.f32.mrb[0].mxu0
        %v1309 = vpop.f32.mrb[0].mxu0
        %1310 = vdwg.mxu0
        %v1311 = vmax.f32 %v1306, 0.0
        %v1312 = vpack.c.bf16 %v1311, %v1311
        %v1313 = vld [vmem:[#allocation4 + $0x140] sm:$0xf]
        %v1314 = vld [vmem:[#allocation4 + $0x144] sm:$0xf]
        %v1315 = vld [vmem:[#allocation4 + $0x148] sm:$0xf]
        %v1316 = vld [vmem:[#allocation4 + $0x14c] sm:$0xf]
        %v1317 = vld [vmem:[#allocation4 + $0x150] sm:$0xf]
        %v1318 = vld [vmem:[#allocation4 + $0x154] sm:$0xf]
        %v1319 = vld [vmem:[#allocation4 + $0x158] sm:$0xf]
        %v1320 = vld [vmem:[#allocation4 + $0x15c] sm:$0xf]
        %v1321 = vld [vmem:[#allocation4 + $0x160] sm:$0xf]
        %v1322 = vld [vmem:[#allocation4 + $0x164] sm:$0xf]
        %v1323 = vld [vmem:[#allocation4 + $0x168] sm:$0xf]
        %v1324 = vld [vmem:[#allocation4 + $0x16c] sm:$0xf]
        %v1325 = vld [vmem:[#allocation4 + $0x170] sm:$0xf]
        %v1326 = vld [vmem:[#allocation4 + $0x174] sm:$0xf]
        %v1327 = vld [vmem:[#allocation4 + $0x178] sm:$0xf]
        %v1328 = vld [vmem:[#allocation4 + $0x17c] sm:$0xf]
        %v1329 = vld [vmem:[%s4 + $0x2] sm:$0x1]
        %v1330 = vlaneseq
        %v1331 = vshrl.u32 %v1330, 7
        %v1332 = vsub.s32 0, %v1331
        %v1333 = vrot.slane %v1329, %v1332
        %v1350 = vunpack.c.l.b16 %v1313
        %v1351 = vunpack.c.l.b16 %v1314
        %v1352 = vunpack.c.l.b16 %v1315
        %v1353 = vunpack.c.l.b16 %v1316
        %v1354 = vunpack.c.l.b16 %v1317
        %v1355 = vunpack.c.l.b16 %v1318
        %v1356 = vunpack.c.l.b16 %v1319
        %v1357 = vunpack.c.l.b16 %v1320
        %v1358 = vunpack.c.l.b16 %v1321
        %v1359 = vunpack.c.l.b16 %v1322
        %v1360 = vunpack.c.l.b16 %v1323
        %v1361 = vunpack.c.l.b16 %v1324
        %v1362 = vunpack.c.l.b16 %v1325
        %v1363 = vunpack.c.l.b16 %v1326
        %v1364 = vunpack.c.l.b16 %v1327
        %v1365 = vunpack.c.l.b16 %v1328
        %v1366 = vpack.c.b16 %v1351, %v1350
        %v1367 = vpack.c.b16 %v1353, %v1352
        %v1368 = vpack.c.b16 %v1355, %v1354
        %v1369 = vpack.c.b16 %v1357, %v1356
        %v1370 = vpack.c.b16 %v1359, %v1358
        %v1371 = vpack.c.b16 %v1361, %v1360
        %v1372 = vpack.c.b16 %v1363, %v1362
        %v1373 = vpack.c.b16 %v1365, %v1364
        %1382 = vmatprep.subr.bf16.mxu0 0
        %1383 = vmatpush1.bf16.msra.mxu0 %v1366
        %1384 = vmatprep.subr.bf16.mxu0 0
        %1385 = vmatpush1.bf16.msra.mxu0 %v1367
        %1386 = vmatprep.subr.bf16.mxu0 0
        %1387 = vmatpush1.bf16.msra.mxu0 %v1368
        %1388 = vmatprep.subr.bf16.mxu0 0
        %1389 = vmatpush1.bf16.msra.mxu0 %v1369
        %1390 = vmatprep.subr.bf16.mxu0 0
        %1391 = vmatpush1.bf16.msra.mxu0 %v1370
        %1392 = vmatprep.subr.bf16.mxu0 0
        %1393 = vmatpush1.bf16.msra.mxu0 %v1371
        %1394 = vmatprep.subr.bf16.mxu0 0
        %1395 = vmatpush1.bf16.msra.mxu0 %v1372
        %1396 = vmatprep.subr.bf16.mxu0 0
        %1397 = vmatpush1.bf16.msra.mxu0 %v1373
        %1398 = vmatprep.subr.bf16.mxu0 0
        %1399 = vmatpush1.bf16.msra.mxu0 0
        %1400 = vmatprep.subr.bf16.mxu0 0
        %1401 = vmatpush1.bf16.msra.mxu0 0
        %1402 = vmatprep.subr.bf16.mxu0 0
        %1403 = vmatpush1.bf16.msra.mxu0 0
        %1404 = vmatprep.subr.bf16.mxu0 0
        %1405 = vmatpush1.bf16.msra.mxu0 0
        %1406 = vmatprep.subr.bf16.mxu0 0
        %1407 = vmatpush1.bf16.msra.mxu0 0
        %1408 = vmatprep.subr.bf16.mxu0 0
        %1409 = vmatpush1.bf16.msra.mxu0 0
        %1410 = vmatprep.subr.bf16.mxu0 0
        %1411 = vmatpush1.bf16.msra.mxu0 0
        %1412 = vmatprep.subr.bf16.mxu0 0
        %1413 = vmatpush1.bf16.msra.mxu0 0
        %1414 = vmatprep.mubr.bf16.mxu0 0
        %1415 = vmatmul.mubr.bf16.gmra.mrb[0].mxu0 %v1312
        %v1416 = vpop.f32.mrb[0].mxu0
        %v1417 = vadd.f32 %v1333, %v1416
        %v1418 = vpop.f32.mrb[0].mxu0
        %v1419 = vpop.f32.mrb[0].mxu0
        %v1420 = vpop.f32.mrb[0].mxu0
        %1421 = vdwg.mxu0
        %1422 = vst [vmem:[%s249] sm:$0xff] %v1417
        %p1423 = scmp.lt.s32.totalorder %s18, 1
        %s1424 = scalar_select %p1423, %s18, 1
        %s1425 = smul.addr %s1424, 8
        %s1426 = scalar_lea.vmem %s5, %s1425
        // Predicated region
        $region49: #{dgaze_pallas.1} parent=39 // pred_check
          %p1427 = pneg %p146
        $region50: #{dgaze_pallas.1} parent=39 // pred_check_branch
          %1429 = sbr.rel (%p1427) target = $region52
        $region51: #{dgaze_pallas.1} parent=39 // pred_region
          _
        $region52: #{dgaze_pallas.1} parent=39 // pred_fallthru
          _
      $region40: #{dgaze_pallas.1} parent=5 // pred_fallthru
        _
      %p1430 = scmp.le.s32.totalorder 2, %s13
      // Predicated region
      $region53: #{dgaze_pallas.1} parent=5 // pred_check
        %p1431 = pneg %p1430
      $region54: #{dgaze_pallas.1} parent=5 // pred_check_branch
        %1433 = sbr.rel (%p1431) target = $region56
      $region55: #{dgaze_pallas.1} parent=5 // pred_region
        %s1434 = ssub.s32 %s13, 2
        // Predicated region
        $region57: #{dgaze_pallas.1} parent=55 // pred_check
          %p1435 = pneg %p152
        $region58: #{dgaze_pallas.1} parent=55 // pred_check_branch
          %1437 = sbr.rel (%p1435) target = $region60
        $region59: #{dgaze_pallas.1} parent=55 // pred_region
          %p1438 = scmp.lt.s32.totalorder %s19, 1
          %s1439 = scalar_select %p1438, %s19, 1
          %s1440 = smul.addr %s1439, 8
          %s1441 = scalar_lea.vmem %s5, %s1440
        $region60: #{dgaze_pallas.1} parent=55 // pred_fallthru
          _
      $region56: #{dgaze_pallas.1} parent=5 // pred_fallthru
        _
    $region6: #{dgaze_pallas.1} parent=1 // loop_footer
      %s17 = sadd.s32 1, %s13
    $region7: #{dgaze_pallas.1} parent=1 // loop_footer_branch
      %12 = sbr.rel target = $region3
    $region8: #{dgaze_pallas.1} parent=1 // loop_exit
      _
    %1442 = vsyncpa [#allocation3], 1
    %s1443 = scalar_lea.sflag [#allocation3], 1
    %1444 = vsyncpa %s1443, 1
    %1445 = vsyncpa [#allocation5], 1

</llo_original>
